<compile_context>
chip_gen: v6e
topology: v6e:2x2x1
jax: 0.10.0
libtpu: 0.0.40
codegen_flags: <defaults>
</compile_context>

<pallas_src>
import functools
import math

import jax
import jax.numpy as jnp
from jax.experimental import pallas as pl
from jax.experimental.pallas import tpu as pltpu


# ----------------------------------------------------------------------------
# Torch-semantics helpers (static, host-side)
# ----------------------------------------------------------------------------
def _torch_style_padding(up_shape_full, skip_shape_full, dims):
    """Replicates pad_if_required's padding computation (incl. its -dim indexing).

    Returns None when no padding is applied, else a per-dim list of (lo, hi) pads
    for the full-rank tensor (F.pad pairs map from the last dim backwards).
    """
    up_shape = tuple(up_shape_full[-dims:])
    skip_shape = tuple(skip_shape_full[-dims:])
    if not (up_shape < skip_shape):          # tuple lexicographic compare, as in torch code
        return None
    padding = []
    for dim in range(dims):
        diff = skip_shape[-dim] - up_shape[-dim]
        padding = [diff // 2, diff // 2 + diff % 2] + padding
    per_dim = [(0, 0)] * len(up_shape_full)
    for i in range(len(padding) // 2):       # F.pad: pair i applies to dim -(i+1)
        per_dim[-(i + 1)] = (padding[2 * i], padding[2 * i + 1])
    return per_dim


_BLOCK_BYTES_BUDGET = 4 * 1024 * 1024        # per grid-step block bytes (x2 double-buffered)


def _pick_channel_tile(c_up, c_skip, up_plane, out_plane, itemsize):
    """Channel tile (multiple of 8 dividing both c_up and c_skip) or None (no blocking)."""
    full = (c_up * up_plane + (c_skip + c_up + c_skip) * out_plane) * itemsize
    if full <= _BLOCK_BYTES_BUDGET:
        return None                           # whole per-batch block already fits comfortably
    g = math.gcd(c_up, c_skip)
    divs = [d for d in range(8, g + 1, 8) if g % d == 0]
    if not divs:
        # TODO(synk): fall back to spatial blocking when channels don't tile cleanly.
        return None
    per_chan = (up_plane + 2 * out_plane) * itemsize
    fitting = [d for d in divs if d * per_chan <= _BLOCK_BYTES_BUDGET]
    return max(fitting) if fitting else min(divs)


# ----------------------------------------------------------------------------
# Kernel bodies
# ----------------------------------------------------------------------------
def _store_up_slab(up_ref, out_ref, n_ch, *, pads, hu, wu, hs, ws):
    """Write the (possibly padded) up block into out_ref[0, :n_ch, :] exactly once.

    up_ref block:  (1, n_ch, hu*wu)   (flattened spatial in the lane dim)
    out_ref block: (1, >=n_ch, hs*ws)
    All offsets / lengths are static Python ints.
    """
    dt = out_ref.dtype
    if pads is None:
        # No padding: hu*wu == hs*ws, single lane-dense store.
        out_ref[0, :n_ch, :] = up_ref[0]
        return

    (ph0, ph1), (pw0, pw1) = pads[-2], pads[-1]
    # F.pad allows negative padding (crop); handle via a static source crop.
    sh0, sh1 = max(-ph0, 0), hu - max(-ph1, 0)
    sw0, sw1 = max(-pw0, 0), wu - max(-pw1, 0)
    dh0, dw0 = max(ph0, 0), max(pw0, 0)
    lh, lw = sh1 - sh0, sw1 - sw0

    if lh <= 0 or lw <= 0:                    # fully cropped away (pathological)
        out_ref[0, :n_ch, :] = jnp.zeros((n_ch, hs * ws), dt)
        return

    if pw0 == 0 and pw1 == 0:
        # W untouched: interior is one contiguous lane-dense run in flat space.
        if dh0 > 0:
            out_ref[0, :n_ch, 0:dh0 * ws] = jnp.zeros((n_ch, dh0 * ws), dt)
        out_ref[0, :n_ch, dh0 * ws:(dh0 + lh) * ws] = up_ref[0, :, sh0 * wu:(sh0 + lh) * wu]
        tail = (hs - dh0 - lh) * ws
        if tail > 0:
            out_ref[0, :n_ch, hs * ws - tail:] = jnp.zeros((n_ch, tail), dt)
        return

    # General case: dense leading zero run, one data store per source row, small
    # zero runs between rows, dense trailing zero run.  No element is written twice.
    lead = dh0 * ws + dw0
    if lead > 0:
        out_ref[0, :n_ch, 0:lead] = jnp.zeros((n_ch, lead), dt)
    gap = ws - lw                             # zeros between consecutive data rows
    for h in range(lh):                       # static unroll (small H in the padded regime)
        src = (sh0 + h) * wu + sw0
        dst = (dh0 + h) * ws + dw0
        out_ref[0, :n_ch, dst:dst + lw] = up_ref[0, :, src:src + lw]
        if h + 1 < lh and gap > 0:
            out_ref[0, :n_ch, dst + lw:dst + lw + gap] = jnp.zeros((n_ch, gap), dt)
    tail = hs * ws - ((dh0 + lh - 1) * ws + dw0 + lw)
    if tail > 0:
        out_ref[0, :n_ch, hs * ws - tail:] = jnp.zeros((n_ch, tail), dt)


def _padded_concat_kernel(up_ref, skip_ref, out_ref, *, c_up, pads, hu, wu, hs, ws):
    # up_ref: (1, c_up, hu*wu)  skip_ref: (1, c_skip, hs*ws)  out_ref: (1, c_up+c_skip, hs*ws)
    _store_up_slab(up_ref, out_ref, c_up, pads=pads, hu=hu, wu=wu, hs=hs, ws=ws)
    out_ref[0, c_up:, :] = skip_ref[0]        # lane-dense full-width copy


def _padded_concat_kernel_blocked(up_ref, skip_ref, out_ref, *, ju, tc, pads, hu, wu, hs, ws):
    # Channel-blocked: grid axis 1 walks output channel tiles; the first `ju` steps
    # are up-channel tiles, the rest are skip-channel tiles.
    j = pl.program_id(1)

    @pl.when(j < ju)
    def _write_up():
        _store_up_slab(up_ref, out_ref, tc, pads=pads, hu=hu, wu=wu, hs=hs, ws=ws)

    @pl.when(j >= ju)
    def _write_skip():
        out_ref[0, :, :] = skip_ref[0]


# ----------------------------------------------------------------------------
# Wrapper
# ----------------------------------------------------------------------------
def padded_concat(up_x, skip_x, dims=2, channel_tile=None):
    """Pallas implementation of PaddedConcat(dims).forward(up_x, skip_x)."""
    assert dims == 2, "kernel implemented for dims=2 (NCHW)"
    assert up_x.ndim == 4 and skip_x.ndim == 4
    assert up_x.shape[0] == skip_x.shape[0]
    assert up_x.dtype == skip_x.dtype

    n, c_up, hu, wu = up_x.shape
    _, c_skip, hs, ws = skip_x.shape
    c_out = c_up + c_skip

    pads = _torch_style_padding(up_x.shape, skip_x.shape, dims)
    if pads is None:
        assert (hu, wu) == (hs, ws), "spatial shapes must match when no padding is applied"
    else:
        assert hu + pads[-2][0] + pads[-2][1] == hs
        assert wu + pads[-1][0] + pads[-1][1] == ws

    itemsize = up_x.dtype.itemsize
    up_plane, out_plane = hu * wu, hs * ws

    # Lane-dense views: flatten H*W into the last (lane) dimension — free reshapes.
    up_f = up_x.reshape(n, c_up, up_plane)
    skip_f = skip_x.reshape(n, c_skip, out_plane)

    cost = pl.CostEstimate(
        flops=0,
        transcendentals=0,
        bytes_accessed=(up_x.size + skip_x.size + n * c_out * out_plane) * itemsize,
    )

    if channel_tile is not None:
        tc = channel_tile
        assert tc % 8 == 0 and c_up % tc == 0 and c_skip % tc == 0, "invalid channel_tile"
    else:
        tc = _pick_channel_tile(c_up, c_skip, up_plane, out_plane, itemsize)

    if tc is None:
        # Unblocked: one full-channel (flattened-spatial) block per batch element.
        full_bytes = (c_up * up_plane + (c_skip + c_out) * out_plane) * itemsize
        kernel = functools.partial(
            _padded_concat_kernel, c_up=c_up, pads=pads, hu=hu, wu=wu, hs=hs, ws=ws
        )
        out_flat = pl.pallas_call(
            kernel,
            out_shape=jax.ShapeDtypeStruct((n, c_out, out_plane), up_x.dtype),
            grid_spec=pltpu.PrefetchScalarGridSpec(
                num_scalar_prefetch=0,
                grid=(n,),
                in_specs=[
                    pl.BlockSpec((1, c_up, up_plane), lambda b: (b, 0, 0)),
                    pl.BlockSpec((1, c_skip, out_plane), lambda b: (b, 0, 0)),
                ],
                out_specs=pl.BlockSpec((1, c_out, out_plane), lambda b: (b, 0, 0)),
            ),
            compiler_params=pltpu.CompilerParams(
                dimension_semantics=("parallel",),
                vmem_limit_bytes=int(
                    min(max(32 * 2**20, 2 * full_bytes + (2 << 20)), 96 * 2**20)
                ),
            ),
            cost_estimate=cost,
        )(up_f, skip_f)
    else:
        # Channel-blocked grid: bounds per-step VMEM (v7x) and adds pipeline steps.
        ju, js = c_up // tc, c_skip // tc
        kernel = functools.partial(
            _padded_concat_kernel_blocked, ju=ju, tc=tc, pads=pads, hu=hu, wu=wu, hs=hs, ws=ws
        )
        out_flat = pl.pallas_call(
            kernel,
            out_shape=jax.ShapeDtypeStruct((n, c_out, out_plane), up_x.dtype),
            grid_spec=pltpu.PrefetchScalarGridSpec(
                num_scalar_prefetch=0,
                grid=(n, ju + js),
                in_specs=[
                    # Clamped index maps: the inactive input keeps its previous block
                    # index, so Pallas never re-fetches it (no duplicate HBM reads).
                    pl.BlockSpec((1, tc, up_plane),
                                 lambda b, j: (b, jnp.minimum(j, ju - 1), 0)),
                    pl.BlockSpec((1, tc, out_plane),
                                 lambda b, j: (b, jnp.maximum(j - ju, 0), 0)),
                ],
                out_specs=pl.BlockSpec((1, tc, out_plane), lambda b, j: (b, j, 0)),
            ),
            compiler_params=pltpu.CompilerParams(
                dimension_semantics=("parallel", "parallel"),
                vmem_limit_bytes=32 * 2**20,
            ),
            cost_estimate=cost,
        )(up_f, skip_f)

    return out_flat.reshape(n, c_out, hs, ws)


# ----------------------------------------------------------------------------
# Pure-JAX reference (same torch semantics, incl. negative pads via crop)
# ----------------------------------------------------------------------------
def _reference(up_x, skip_x, dims=2):
    pads = _torch_style_padding(up_x.shape, skip_x.shape, dims)
    if pads is not None:
        crop = [(max(-lo, 0), max(-hi, 0)) for lo, hi in pads]
        sl = tuple(slice(c0, up_x.shape[i] - c1) for i, (c0, c1) in enumerate(crop))
        up_x = up_x[sl]
        pos = [(max(lo, 0), max(hi, 0)) for lo, hi in pads]
        up_x = jnp.pad(up_x, pos)
    return jnp.concatenate((up_x, skip_x), axis=1)


if __name__ == "__main__":
    key = jax.random.PRNGKey(0)
    k1, k2, k3, k4 = jax.random.split(key, 4)

    # 1) Padded path (both H and W padded), typical UNet decoder level.
    up_x = jax.random.normal(k1, (2, 4, 14, 14), dtype=jnp.float32)
    skip_x = jax.random.normal(k2, (2, 4, 16, 16), dtype=jnp.float32)
    out = jax.block_until_ready(padded_concat(up_x, skip_x, dims=2))
    assert out.shape == (2, 8, 16, 16), out.shape
    assert jnp.array_equal(out, _reference(up_x, skip_x, dims=2)), "mismatch (padded path)"

    # 2) No-padding path (equal spatial shapes, unequal channel counts).
    up_eq = jax.random.normal(k3, (2, 3, 16, 16), dtype=jnp.float32)
    out_eq = jax.block_until_ready(padded_concat(up_eq, skip_x, dims=2))
    assert jnp.array_equal(out_eq, _reference(up_eq, skip_x, dims=2)), "mismatch (no-pad path)"

    # 3) Asymmetric spatial diffs (Hu != Wu, odd diffs) — would expose any H/W swap.
    up_a = jax.random.normal(k4, (2, 4, 13, 10), dtype=jnp.float32)
    out_a = jax.block_until_ready(padded_concat(up_a, skip_x, dims=2))
    assert jnp.array_equal(out_a, _reference(up_a, skip_x, dims=2)), "mismatch (asymmetric)"

    # 4) Mixed case: lexicographic compare takes the pad path with a negative W pad (crop).
    up_m = jax.random.normal(k1, (2, 4, 14, 18), dtype=jnp.float32)
    out_m = jax.block_until_ready(padded_concat(up_m, skip_x, dims=2))
    assert jnp.array_equal(out_m, _reference(up_m, skip_x, dims=2)), "mismatch (crop path)"

    # 5) Channel-blocked path (what realistic v7x-sized activations take), forced at a
    #    small shape via an explicit channel tile.
    up_b = jax.random.normal(k2, (2, 16, 14, 14), dtype=jnp.float32)
    skip_b = jax.random.normal(k3, (2, 16, 16, 16), dtype=jnp.float32)
    out_b = jax.block_until_ready(padded_concat(up_b, skip_b, dims=2, channel_tile=8))
    assert jnp.array_equal(out_b, _reference(up_b, skip_b, dims=2)), "mismatch (blocked path)"

    print("KERNEL_OK")
</pallas_src>

<mosaic_0001>
module attributes {stable_mosaic.version = 11 : i64} {
  func.func @_padded_concat_kernel(%arg0: i32, %arg1: memref<1x4x196xf32, #tpu.memory_space<vmem>>, %arg2: memref<1x4x256xf32, #tpu.memory_space<vmem>>, %arg3: memref<1x8x256xf32, #tpu.memory_space<vmem>>) attributes {dimension_semantics = [#tpu.dimension_semantics<parallel>], iteration_bounds = array<i64: 2>, scalar_prefetch = 0 : i64, scratch_operands = 0 : i64, tpu.core_type = #tpu.core_type<tc>, window_params = [{transform_indices = @transform_0, window_bounds = array<i64: 1, 4, 196>}, {transform_indices = @transform_1, window_bounds = array<i64: 1, 4, 256>}, {transform_indices = @transform_2, window_bounds = array<i64: 1, 8, 256>}]} {
    %cst = arith.constant 0.000000e+00 : f32
    %0 = vector.broadcast %cst : f32 to vector<4x17xf32>
    %c0 = arith.constant 0 : index
    %c0_0 = arith.constant 0 : index
    %c0_1 = arith.constant 0 : index
    %1 = vector.load %arg3[%c0, %c0_0, %c0_1] : memref<1x8x256xf32, #tpu.memory_space<vmem>>, vector<1x4x17xf32>
    %2 = vector.shape_cast %1 : vector<1x4x17xf32> to vector<4x17xf32>
    %3 = vector.shape_cast %0 : vector<4x17xf32> to vector<1x4x17xf32>
    tpu.vector_store %arg3[%c0, %c0_0, %c0_1], %3 {strides = array<i32>} : memref<1x8x256xf32, #tpu.memory_space<vmem>>, vector<1x4x17xf32>,
    %c0_2 = arith.constant 0 : index
    %c0_3 = arith.constant 0 : index
    %c0_4 = arith.constant 0 : index
    %4 = vector.load %arg1[%c0_2, %c0_3, %c0_4] : memref<1x4x196xf32, #tpu.memory_space<vmem>>, vector<1x4x14xf32>
    %5 = vector.shape_cast %4 : vector<1x4x14xf32> to vector<4x14xf32>
    %c0_5 = arith.constant 0 : index
    %c0_6 = arith.constant 0 : index
    %c17 = arith.constant 17 : index
    %6 = vector.load %arg3[%c0_5, %c0_6, %c17] : memref<1x8x256xf32, #tpu.memory_space<vmem>>, vector<1x4x14xf32>
    %7 = vector.shape_cast %6 : vector<1x4x14xf32> to vector<4x14xf32>
    %8 = vector.shape_cast %5 : vector<4x14xf32> to vector<1x4x14xf32>
    tpu.vector_store %arg3[%c0_5, %c0_6, %c17], %8 {strides = array<i32>} : memref<1x8x256xf32, #tpu.memory_space<vmem>>, vector<1x4x14xf32>,
    %cst_7 = arith.constant 0.000000e+00 : f32
    %9 = vector.broadcast %cst_7 : f32 to vector<4x2xf32>
    %c0_8 = arith.constant 0 : index
    %c0_9 = arith.constant 0 : index
    %c31 = arith.constant 31 : index
    %10 = vector.load %arg3[%c0_8, %c0_9, %c31] : memref<1x8x256xf32, #tpu.memory_space<vmem>>, vector<1x4x2xf32>
    %11 = vector.shape_cast %10 : vector<1x4x2xf32> to vector<4x2xf32>
    %12 = vector.shape_cast %9 : vector<4x2xf32> to vector<1x4x2xf32>
    tpu.vector_store %arg3[%c0_8, %c0_9, %c31], %12 {strides = array<i32>} : memref<1x8x256xf32, #tpu.memory_space<vmem>>, vector<1x4x2xf32>,
    %c0_10 = arith.constant 0 : index
    %c0_11 = arith.constant 0 : index
    %c14 = arith.constant 14 : index
    %13 = vector.load %arg1[%c0_10, %c0_11, %c14] : memref<1x4x196xf32, #tpu.memory_space<vmem>>, vector<1x4x14xf32>
    %14 = vector.shape_cast %13 : vector<1x4x14xf32> to vector<4x14xf32>
    %c0_12 = arith.constant 0 : index
    %c0_13 = arith.constant 0 : index
    %c33 = arith.constant 33 : index
    %15 = vector.load %arg3[%c0_12, %c0_13, %c33] : memref<1x8x256xf32, #tpu.memory_space<vmem>>, vector<1x4x14xf32>
    %16 = vector.shape_cast %15 : vector<1x4x14xf32> to vector<4x14xf32>
    %17 = vector.shape_cast %14 : vector<4x14xf32> to vector<1x4x14xf32>
    tpu.vector_store %arg3[%c0_12, %c0_13, %c33], %17 {strides = array<i32>} : memref<1x8x256xf32, #tpu.memory_space<vmem>>, vector<1x4x14xf32>,
    %cst_14 = arith.constant 0.000000e+00 : f32
    %18 = vector.broadcast %cst_14 : f32 to vector<4x2xf32>
    %c0_15 = arith.constant 0 : index
    %c0_16 = arith.constant 0 : index
    %c47 = arith.constant 47 : index
    %19 = vector.load %arg3[%c0_15, %c0_16, %c47] : memref<1x8x256xf32, #tpu.memory_space<vmem>>, vector<1x4x2xf32>
    %20 = vector.shape_cast %19 : vector<1x4x2xf32> to vector<4x2xf32>
    %21 = vector.shape_cast %18 : vector<4x2xf32> to vector<1x4x2xf32>
    tpu.vector_store %arg3[%c0_15, %c0_16, %c47], %21 {strides = array<i32>} : memref<1x8x256xf32, #tpu.memory_space<vmem>>, vector<1x4x2xf32>,
    %c0_17 = arith.constant 0 : index
    %c0_18 = arith.constant 0 : index
    %c28 = arith.constant 28 : index
    %22 = vector.load %arg1[%c0_17, %c0_18, %c28] : memref<1x4x196xf32, #tpu.memory_space<vmem>>, vector<1x4x14xf32>
    %23 = vector.shape_cast %22 : vector<1x4x14xf32> to vector<4x14xf32>
    %c0_19 = arith.constant 0 : index
    %c0_20 = arith.constant 0 : index
    %c49 = arith.constant 49 : index
    %24 = vector.load %arg3[%c0_19, %c0_20, %c49] : memref<1x8x256xf32, #tpu.memory_space<vmem>>, vector<1x4x14xf32>
    %25 = vector.shape_cast %24 : vector<1x4x14xf32> to vector<4x14xf32>
    %26 = vector.shape_cast %23 : vector<4x14xf32> to vector<1x4x14xf32>
    tpu.vector_store %arg3[%c0_19, %c0_20, %c49], %26 {strides = array<i32>} : memref<1x8x256xf32, #tpu.memory_space<vmem>>, vector<1x4x14xf32>,
    %cst_21 = arith.constant 0.000000e+00 : f32
    %27 = vector.broadcast %cst_21 : f32 to vector<4x2xf32>
    %c0_22 = arith.constant 0 : index
    %c0_23 = arith.constant 0 : index
    %c63 = arith.constant 63 : index
    %28 = vector.load %arg3[%c0_22, %c0_23, %c63] : memref<1x8x256xf32, #tpu.memory_space<vmem>>, vector<1x4x2xf32>
    %29 = vector.shape_cast %28 : vector<1x4x2xf32> to vector<4x2xf32>
    %30 = vector.shape_cast %27 : vector<4x2xf32> to vector<1x4x2xf32>
    tpu.vector_store %arg3[%c0_22, %c0_23, %c63], %30 {strides = array<i32>} : memref<1x8x256xf32, #tpu.memory_space<vmem>>, vector<1x4x2xf32>,
    %c0_24 = arith.constant 0 : index
    %c0_25 = arith.constant 0 : index
    %c42 = arith.constant 42 : index
    %31 = vector.load %arg1[%c0_24, %c0_25, %c42] : memref<1x4x196xf32, #tpu.memory_space<vmem>>, vector<1x4x14xf32>
    %32 = vector.shape_cast %31 : vector<1x4x14xf32> to vector<4x14xf32>
    %c0_26 = arith.constant 0 : index
    %c0_27 = arith.constant 0 : index
    %c65 = arith.constant 65 : index
    %33 = vector.load %arg3[%c0_26, %c0_27, %c65] : memref<1x8x256xf32, #tpu.memory_space<vmem>>, vector<1x4x14xf32>
    %34 = vector.shape_cast %33 : vector<1x4x14xf32> to vector<4x14xf32>
    %35 = vector.shape_cast %32 : vector<4x14xf32> to vector<1x4x14xf32>
    tpu.vector_store %arg3[%c0_26, %c0_27, %c65], %35 {strides = array<i32>} : memref<1x8x256xf32, #tpu.memory_space<vmem>>, vector<1x4x14xf32>,
    %cst_28 = arith.constant 0.000000e+00 : f32
    %36 = vector.broadcast %cst_28 : f32 to vector<4x2xf32>
    %c0_29 = arith.constant 0 : index
    %c0_30 = arith.constant 0 : index
    %c79 = arith.constant 79 : index
    %37 = vector.load %arg3[%c0_29, %c0_30, %c79] : memref<1x8x256xf32, #tpu.memory_space<vmem>>, vector<1x4x2xf32>
    %38 = vector.shape_cast %37 : vector<1x4x2xf32> to vector<4x2xf32>
    %39 = vector.shape_cast %36 : vector<4x2xf32> to vector<1x4x2xf32>
    tpu.vector_store %arg3[%c0_29, %c0_30, %c79], %39 {strides = array<i32>} : memref<1x8x256xf32, #tpu.memory_space<vmem>>, vector<1x4x2xf32>,
    %c0_31 = arith.constant 0 : index
    %c0_32 = arith.constant 0 : index
    %c56 = arith.constant 56 : index
    %40 = vector.load %arg1[%c0_31, %c0_32, %c56] : memref<1x4x196xf32, #tpu.memory_space<vmem>>, vector<1x4x14xf32>
    %41 = vector.shape_cast %40 : vector<1x4x14xf32> to vector<4x14xf32>
    %c0_33 = arith.constant 0 : index
    %c0_34 = arith.constant 0 : index
    %c81 = arith.constant 81 : index
    %42 = vector.load %arg3[%c0_33, %c0_34, %c81] : memref<1x8x256xf32, #tpu.memory_space<vmem>>, vector<1x4x14xf32>
    %43 = vector.shape_cast %42 : vector<1x4x14xf32> to vector<4x14xf32>
    %44 = vector.shape_cast %41 : vector<4x14xf32> to vector<1x4x14xf32>
    tpu.vector_store %arg3[%c0_33, %c0_34, %c81], %44 {strides = array<i32>} : memref<1x8x256xf32, #tpu.memory_space<vmem>>, vector<1x4x14xf32>,
    %cst_35 = arith.constant 0.000000e+00 : f32
    %45 = vector.broadcast %cst_35 : f32 to vector<4x2xf32>
    %c0_36 = arith.constant 0 : index
    %c0_37 = arith.constant 0 : index
    %c95 = arith.constant 95 : index
    %46 = vector.load %arg3[%c0_36, %c0_37, %c95] : memref<1x8x256xf32, #tpu.memory_space<vmem>>, vector<1x4x2xf32>
    %47 = vector.shape_cast %46 : vector<1x4x2xf32> to vector<4x2xf32>
    %48 = vector.shape_cast %45 : vector<4x2xf32> to vector<1x4x2xf32>
    tpu.vector_store %arg3[%c0_36, %c0_37, %c95], %48 {strides = array<i32>} : memref<1x8x256xf32, #tpu.memory_space<vmem>>, vector<1x4x2xf32>,
    %c0_38 = arith.constant 0 : index
    %c0_39 = arith.constant 0 : index
    %c70 = arith.constant 70 : index
    %49 = vector.load %arg1[%c0_38, %c0_39, %c70] : memref<1x4x196xf32, #tpu.memory_space<vmem>>, vector<1x4x14xf32>
    %50 = vector.shape_cast %49 : vector<1x4x14xf32> to vector<4x14xf32>
    %c0_40 = arith.constant 0 : index
    %c0_41 = arith.constant 0 : index
    %c97 = arith.constant 97 : index
    %51 = vector.load %arg3[%c0_40, %c0_41, %c97] : memref<1x8x256xf32, #tpu.memory_space<vmem>>, vector<1x4x14xf32>
    %52 = vector.shape_cast %51 : vector<1x4x14xf32> to vector<4x14xf32>
    %53 = vector.shape_cast %50 : vector<4x14xf32> to vector<1x4x14xf32>
    tpu.vector_store %arg3[%c0_40, %c0_41, %c97], %53 {strides = array<i32>} : memref<1x8x256xf32, #tpu.memory_space<vmem>>, vector<1x4x14xf32>,
    %cst_42 = arith.constant 0.000000e+00 : f32
    %54 = vector.broadcast %cst_42 : f32 to vector<4x2xf32>
    %c0_43 = arith.constant 0 : index
    %c0_44 = arith.constant 0 : index
    %c111 = arith.constant 111 : index
    %55 = vector.load %arg3[%c0_43, %c0_44, %c111] : memref<1x8x256xf32, #tpu.memory_space<vmem>>, vector<1x4x2xf32>
    %56 = vector.shape_cast %55 : vector<1x4x2xf32> to vector<4x2xf32>
    %57 = vector.shape_cast %54 : vector<4x2xf32> to vector<1x4x2xf32>
    tpu.vector_store %arg3[%c0_43, %c0_44, %c111], %57 {strides = array<i32>} : memref<1x8x256xf32, #tpu.memory_space<vmem>>, vector<1x4x2xf32>,
    %c0_45 = arith.constant 0 : index
    %c0_46 = arith.constant 0 : index
    %c84 = arith.constant 84 : index
    %58 = vector.load %arg1[%c0_45, %c0_46, %c84] : memref<1x4x196xf32, #tpu.memory_space<vmem>>, vector<1x4x14xf32>
    %59 = vector.shape_cast %58 : vector<1x4x14xf32> to vector<4x14xf32>
    %c0_47 = arith.constant 0 : index
    %c0_48 = arith.constant 0 : index
    %c113 = arith.constant 113 : index
    %60 = vector.load %arg3[%c0_47, %c0_48, %c113] : memref<1x8x256xf32, #tpu.memory_space<vmem>>, vector<1x4x14xf32>
    %61 = vector.shape_cast %60 : vector<1x4x14xf32> to vector<4x14xf32>
    %62 = vector.shape_cast %59 : vector<4x14xf32> to vector<1x4x14xf32>
    tpu.vector_store %arg3[%c0_47, %c0_48, %c113], %62 {strides = array<i32>} : memref<1x8x256xf32, #tpu.memory_space<vmem>>, vector<1x4x14xf32>,
    %cst_49 = arith.constant 0.000000e+00 : f32
    %63 = vector.broadcast %cst_49 : f32 to vector<4x2xf32>
    %c0_50 = arith.constant 0 : index
    %c0_51 = arith.constant 0 : index
    %c127 = arith.constant 127 : index
    %64 = vector.load %arg3[%c0_50, %c0_51, %c127] : memref<1x8x256xf32, #tpu.memory_space<vmem>>, vector<1x4x2xf32>
    %65 = vector.shape_cast %64 : vector<1x4x2xf32> to vector<4x2xf32>
    %66 = vector.shape_cast %63 : vector<4x2xf32> to vector<1x4x2xf32>
    tpu.vector_store %arg3[%c0_50, %c0_51, %c127], %66 {strides = array<i32>} : memref<1x8x256xf32, #tpu.memory_space<vmem>>, vector<1x4x2xf32>,
    %c0_52 = arith.constant 0 : index
    %c0_53 = arith.constant 0 : index
    %c98 = arith.constant 98 : index
    %67 = vector.load %arg1[%c0_52, %c0_53, %c98] : memref<1x4x196xf32, #tpu.memory_space<vmem>>, vector<1x4x14xf32>
    %68 = vector.shape_cast %67 : vector<1x4x14xf32> to vector<4x14xf32>
    %c0_54 = arith.constant 0 : index
    %c0_55 = arith.constant 0 : index
    %c129 = arith.constant 129 : index
    %69 = vector.load %arg3[%c0_54, %c0_55, %c129] : memref<1x8x256xf32, #tpu.memory_space<vmem>>, vector<1x4x14xf32>
    %70 = vector.shape_cast %69 : vector<1x4x14xf32> to vector<4x14xf32>
    %71 = vector.shape_cast %68 : vector<4x14xf32> to vector<1x4x14xf32>
    tpu.vector_store %arg3[%c0_54, %c0_55, %c129], %71 {strides = array<i32>} : memref<1x8x256xf32, #tpu.memory_space<vmem>>, vector<1x4x14xf32>,
    %cst_56 = arith.constant 0.000000e+00 : f32
    %72 = vector.broadcast %cst_56 : f32 to vector<4x2xf32>
    %c0_57 = arith.constant 0 : index
    %c0_58 = arith.constant 0 : index
    %c143 = arith.constant 143 : index
    %73 = vector.load %arg3[%c0_57, %c0_58, %c143] : memref<1x8x256xf32, #tpu.memory_space<vmem>>, vector<1x4x2xf32>
    %74 = vector.shape_cast %73 : vector<1x4x2xf32> to vector<4x2xf32>
    %75 = vector.shape_cast %72 : vector<4x2xf32> to vector<1x4x2xf32>
    tpu.vector_store %arg3[%c0_57, %c0_58, %c143], %75 {strides = array<i32>} : memref<1x8x256xf32, #tpu.memory_space<vmem>>, vector<1x4x2xf32>,
    %c0_59 = arith.constant 0 : index
    %c0_60 = arith.constant 0 : index
    %c112 = arith.constant 112 : index
    %76 = vector.load %arg1[%c0_59, %c0_60, %c112] : memref<1x4x196xf32, #tpu.memory_space<vmem>>, vector<1x4x14xf32>
    %77 = vector.shape_cast %76 : vector<1x4x14xf32> to vector<4x14xf32>
    %c0_61 = arith.constant 0 : index
    %c0_62 = arith.constant 0 : index
    %c145 = arith.constant 145 : index
    %78 = vector.load %arg3[%c0_61, %c0_62, %c145] : memref<1x8x256xf32, #tpu.memory_space<vmem>>, vector<1x4x14xf32>
    %79 = vector.shape_cast %78 : vector<1x4x14xf32> to vector<4x14xf32>
    %80 = vector.shape_cast %77 : vector<4x14xf32> to vector<1x4x14xf32>
    tpu.vector_store %arg3[%c0_61, %c0_62, %c145], %80 {strides = array<i32>} : memref<1x8x256xf32, #tpu.memory_space<vmem>>, vector<1x4x14xf32>,
    %cst_63 = arith.constant 0.000000e+00 : f32
    %81 = vector.broadcast %cst_63 : f32 to vector<4x2xf32>
    %c0_64 = arith.constant 0 : index
    %c0_65 = arith.constant 0 : index
    %c159 = arith.constant 159 : index
    %82 = vector.load %arg3[%c0_64, %c0_65, %c159] : memref<1x8x256xf32, #tpu.memory_space<vmem>>, vector<1x4x2xf32>
    %83 = vector.shape_cast %82 : vector<1x4x2xf32> to vector<4x2xf32>
    %84 = vector.shape_cast %81 : vector<4x2xf32> to vector<1x4x2xf32>
    tpu.vector_store %arg3[%c0_64, %c0_65, %c159], %84 {strides = array<i32>} : memref<1x8x256xf32, #tpu.memory_space<vmem>>, vector<1x4x2xf32>,
    %c0_66 = arith.constant 0 : index
    %c0_67 = arith.constant 0 : index
    %c126 = arith.constant 126 : index
    %85 = vector.load %arg1[%c0_66, %c0_67, %c126] : memref<1x4x196xf32, #tpu.memory_space<vmem>>, vector<1x4x14xf32>
    %86 = vector.shape_cast %85 : vector<1x4x14xf32> to vector<4x14xf32>
    %c0_68 = arith.constant 0 : index
    %c0_69 = arith.constant 0 : index
    %c161 = arith.constant 161 : index
    %87 = vector.load %arg3[%c0_68, %c0_69, %c161] : memref<1x8x256xf32, #tpu.memory_space<vmem>>, vector<1x4x14xf32>
    %88 = vector.shape_cast %87 : vector<1x4x14xf32> to vector<4x14xf32>
    %89 = vector.shape_cast %86 : vector<4x14xf32> to vector<1x4x14xf32>
    tpu.vector_store %arg3[%c0_68, %c0_69, %c161], %89 {strides = array<i32>} : memref<1x8x256xf32, #tpu.memory_space<vmem>>, vector<1x4x14xf32>,
    %cst_70 = arith.constant 0.000000e+00 : f32
    %90 = vector.broadcast %cst_70 : f32 to vector<4x2xf32>
    %c0_71 = arith.constant 0 : index
    %c0_72 = arith.constant 0 : index
    %c175 = arith.constant 175 : index
    %91 = vector.load %arg3[%c0_71, %c0_72, %c175] : memref<1x8x256xf32, #tpu.memory_space<vmem>>, vector<1x4x2xf32>
    %92 = vector.shape_cast %91 : vector<1x4x2xf32> to vector<4x2xf32>
    %93 = vector.shape_cast %90 : vector<4x2xf32> to vector<1x4x2xf32>
    tpu.vector_store %arg3[%c0_71, %c0_72, %c175], %93 {strides = array<i32>} : memref<1x8x256xf32, #tpu.memory_space<vmem>>, vector<1x4x2xf32>,
    %c0_73 = arith.constant 0 : index
    %c0_74 = arith.constant 0 : index
    %c140 = arith.constant 140 : index
    %94 = vector.load %arg1[%c0_73, %c0_74, %c140] : memref<1x4x196xf32, #tpu.memory_space<vmem>>, vector<1x4x14xf32>
    %95 = vector.shape_cast %94 : vector<1x4x14xf32> to vector<4x14xf32>
    %c0_75 = arith.constant 0 : index
    %c0_76 = arith.constant 0 : index
    %c177 = arith.constant 177 : index
    %96 = vector.load %arg3[%c0_75, %c0_76, %c177] : memref<1x8x256xf32, #tpu.memory_space<vmem>>, vector<1x4x14xf32>
    %97 = vector.shape_cast %96 : vector<1x4x14xf32> to vector<4x14xf32>
    %98 = vector.shape_cast %95 : vector<4x14xf32> to vector<1x4x14xf32>
    tpu.vector_store %arg3[%c0_75, %c0_76, %c177], %98 {strides = array<i32>} : memref<1x8x256xf32, #tpu.memory_space<vmem>>, vector<1x4x14xf32>,
    %cst_77 = arith.constant 0.000000e+00 : f32
    %99 = vector.broadcast %cst_77 : f32 to vector<4x2xf32>
    %c0_78 = arith.constant 0 : index
    %c0_79 = arith.constant 0 : index
    %c191 = arith.constant 191 : index
    %100 = vector.load %arg3[%c0_78, %c0_79, %c191] : memref<1x8x256xf32, #tpu.memory_space<vmem>>, vector<1x4x2xf32>
    %101 = vector.shape_cast %100 : vector<1x4x2xf32> to vector<4x2xf32>
    %102 = vector.shape_cast %99 : vector<4x2xf32> to vector<1x4x2xf32>
    tpu.vector_store %arg3[%c0_78, %c0_79, %c191], %102 {strides = array<i32>} : memref<1x8x256xf32, #tpu.memory_space<vmem>>, vector<1x4x2xf32>,
    %c0_80 = arith.constant 0 : index
    %c0_81 = arith.constant 0 : index
    %c154 = arith.constant 154 : index
    %103 = vector.load %arg1[%c0_80, %c0_81, %c154] : memref<1x4x196xf32, #tpu.memory_space<vmem>>, vector<1x4x14xf32>
    %104 = vector.shape_cast %103 : vector<1x4x14xf32> to vector<4x14xf32>
    %c0_82 = arith.constant 0 : index
    %c0_83 = arith.constant 0 : index
    %c193 = arith.constant 193 : index
    %105 = vector.load %arg3[%c0_82, %c0_83, %c193] : memref<1x8x256xf32, #tpu.memory_space<vmem>>, vector<1x4x14xf32>
    %106 = vector.shape_cast %105 : vector<1x4x14xf32> to vector<4x14xf32>
    %107 = vector.shape_cast %104 : vector<4x14xf32> to vector<1x4x14xf32>
    tpu.vector_store %arg3[%c0_82, %c0_83, %c193], %107 {strides = array<i32>} : memref<1x8x256xf32, #tpu.memory_space<vmem>>, vector<1x4x14xf32>,
    %cst_84 = arith.constant 0.000000e+00 : f32
    %108 = vector.broadcast %cst_84 : f32 to vector<4x2xf32>
    %c0_85 = arith.constant 0 : index
    %c0_86 = arith.constant 0 : index
    %c207 = arith.constant 207 : index
    %109 = vector.load %arg3[%c0_85, %c0_86, %c207] : memref<1x8x256xf32, #tpu.memory_space<vmem>>, vector<1x4x2xf32>
    %110 = vector.shape_cast %109 : vector<1x4x2xf32> to vector<4x2xf32>
    %111 = vector.shape_cast %108 : vector<4x2xf32> to vector<1x4x2xf32>
    tpu.vector_store %arg3[%c0_85, %c0_86, %c207], %111 {strides = array<i32>} : memref<1x8x256xf32, #tpu.memory_space<vmem>>, vector<1x4x2xf32>,
    %c0_87 = arith.constant 0 : index
    %c0_88 = arith.constant 0 : index
    %c168 = arith.constant 168 : index
    %112 = vector.load %arg1[%c0_87, %c0_88, %c168] : memref<1x4x196xf32, #tpu.memory_space<vmem>>, vector<1x4x14xf32>
    %113 = vector.shape_cast %112 : vector<1x4x14xf32> to vector<4x14xf32>
    %c0_89 = arith.constant 0 : index
    %c0_90 = arith.constant 0 : index
    %c209 = arith.constant 209 : index
    %114 = vector.load %arg3[%c0_89, %c0_90, %c209] : memref<1x8x256xf32, #tpu.memory_space<vmem>>, vector<1x4x14xf32>
    %115 = vector.shape_cast %114 : vector<1x4x14xf32> to vector<4x14xf32>
    %116 = vector.shape_cast %113 : vector<4x14xf32> to vector<1x4x14xf32>
    tpu.vector_store %arg3[%c0_89, %c0_90, %c209], %116 {strides = array<i32>} : memref<1x8x256xf32, #tpu.memory_space<vmem>>, vector<1x4x14xf32>,
    %cst_91 = arith.constant 0.000000e+00 : f32
    %117 = vector.broadcast %cst_91 : f32 to vector<4x2xf32>
    %c0_92 = arith.constant 0 : index
    %c0_93 = arith.constant 0 : index
    %c223 = arith.constant 223 : index
    %118 = vector.load %arg3[%c0_92, %c0_93, %c223] : memref<1x8x256xf32, #tpu.memory_space<vmem>>, vector<1x4x2xf32>
    %119 = vector.shape_cast %118 : vector<1x4x2xf32> to vector<4x2xf32>
    %120 = vector.shape_cast %117 : vector<4x2xf32> to vector<1x4x2xf32>
    tpu.vector_store %arg3[%c0_92, %c0_93, %c223], %120 {strides = array<i32>} : memref<1x8x256xf32, #tpu.memory_space<vmem>>, vector<1x4x2xf32>,
    %c0_94 = arith.constant 0 : index
    %c0_95 = arith.constant 0 : index
    %c182 = arith.constant 182 : index
    %121 = vector.load %arg1[%c0_94, %c0_95, %c182] : memref<1x4x196xf32, #tpu.memory_space<vmem>>, vector<1x4x14xf32>
    %122 = vector.shape_cast %121 : vector<1x4x14xf32> to vector<4x14xf32>
    %c0_96 = arith.constant 0 : index
    %c0_97 = arith.constant 0 : index
    %c225 = arith.constant 225 : index
    %123 = vector.load %arg3[%c0_96, %c0_97, %c225] : memref<1x8x256xf32, #tpu.memory_space<vmem>>, vector<1x4x14xf32>
    %124 = vector.shape_cast %123 : vector<1x4x14xf32> to vector<4x14xf32>
    %125 = vector.shape_cast %122 : vector<4x14xf32> to vector<1x4x14xf32>
    tpu.vector_store %arg3[%c0_96, %c0_97, %c225], %125 {strides = array<i32>} : memref<1x8x256xf32, #tpu.memory_space<vmem>>, vector<1x4x14xf32>,
    %cst_98 = arith.constant 0.000000e+00 : f32
    %126 = vector.broadcast %cst_98 : f32 to vector<4x17xf32>
    %c0_99 = arith.constant 0 : index
    %c0_100 = arith.constant 0 : index
    %c239 = arith.constant 239 : index
    %127 = vector.load %arg3[%c0_99, %c0_100, %c239] : memref<1x8x256xf32, #tpu.memory_space<vmem>>, vector<1x4x17xf32>
    %128 = vector.shape_cast %127 : vector<1x4x17xf32> to vector<4x17xf32>
    %129 = vector.shape_cast %126 : vector<4x17xf32> to vector<1x4x17xf32>
    tpu.vector_store %arg3[%c0_99, %c0_100, %c239], %129 {strides = array<i32>} : memref<1x8x256xf32, #tpu.memory_space<vmem>>, vector<1x4x17xf32>,
    %c0_101 = arith.constant 0 : index
    %c0_102 = arith.constant 0 : index
    %c0_103 = arith.constant 0 : index
    %130 = vector.load %arg2[%c0_101, %c0_102, %c0_103] : memref<1x4x256xf32, #tpu.memory_space<vmem>>, vector<1x4x256xf32>
    %131 = vector.shape_cast %130 : vector<1x4x256xf32> to vector<4x256xf32>
    %c0_104 = arith.constant 0 : index
    %c4 = arith.constant 4 : index
    %c0_105 = arith.constant 0 : index
    %132 = vector.load %arg3[%c0_104, %c4, %c0_105] : memref<1x8x256xf32, #tpu.memory_space<vmem>>, vector<1x4x256xf32>
    %133 = vector.shape_cast %132 : vector<1x4x256xf32> to vector<4x256xf32>
    %134 = vector.shape_cast %131 : vector<4x256xf32> to vector<1x4x256xf32>
    tpu.vector_store %arg3[%c0_104, %c4, %c0_105], %134 {strides = array<i32>} : memref<1x8x256xf32, #tpu.memory_space<vmem>>, vector<1x4x256xf32>,
    return
  }
  func.func @transform_0(%arg0: i32) -> (i32, i32, i32) {
    %c0_i32 = arith.constant 0 : i32
    %c0_i32_0 = arith.constant 0 : i32
    %c0_i32_1 = arith.constant 0 : i32
    return %arg0, %c0_i32, %c0_i32_0 : i32, i32, i32
  }
  func.func @transform_1(%arg0: i32) -> (i32, i32, i32) {
    %c0_i32 = arith.constant 0 : i32
    %c0_i32_0 = arith.constant 0 : i32
    %c0_i32_1 = arith.constant 0 : i32
    return %arg0, %c0_i32, %c0_i32_0 : i32, i32, i32
  }
  func.func @transform_2(%arg0: i32) -> (i32, i32, i32) {
    %c0_i32 = arith.constant 0 : i32
    %c0_i32_0 = arith.constant 0 : i32
    %c0_i32_1 = arith.constant 0 : i32
    return %arg0, %c0_i32, %c0_i32_0 : i32, i32, i32
  }
}

</mosaic_0001>

<llo_original>
// kernel: tpu_custom_call.1
$region0: #{tpu_custom_call.1}
  #allocation0 [shape = 'u32[]', space=smem, size = 0x4, offset = 0x4, fixed_abs, tag = 'smem constant byte address 0x4 - core index']
  #allocation1 [shape = 'u32[144,128]{1,0:T(1,128)}', space=vmem, size = 0x12000, scoped, tag = 'internal scratch']
  %s0 = inlined_call_operand.hbm [shape: f32[2,4,196], index: 0, kind: input, shape index: {}]
  %s1 = inlined_call_operand.hbm [shape: f32[2,4,256], index: 1, kind: input, shape index: {}]
  %s2 = inlined_call_operand.hbm [shape: f32[2,8,256], index: 2, kind: output, shape index: {}]
  %s3 = sld [smem:[#allocation0]]
  $region49: #{tpu_custom_call.1} parent=0
    _
  %s5 = ssub.s32 1, %s3
  %s6 = scalar_select 0, %s5, %s3
  $region1: #{tpu_custom_call.1} parent=0
    #allocation2 [shape = 'u8[8192]{0}', space=vmem, size = 0x2000, scoped, tag = 'input window, operand 0']
    #allocation3 [shape = 's32[2]{0}', space=sflag, size = 0x8, scoped, tag = 'scoped memory for tpu_custom_call.1']
    #allocation4 [shape = 's32[2]{0}', space=sflag, size = 0x8, scoped, tag = 'scoped memory for tpu_custom_call.1']
    #allocation5 [shape = 'u8[8192]{0}', space=vmem, size = 0x2000, scoped, tag = 'input window, operand 1']
    #allocation6 [shape = 's32[2]{0}', space=sflag, size = 0x8, scoped, tag = 'scoped memory for tpu_custom_call.1']
    #allocation7 [shape = 'u8[16384]{0}', space=vmem, size = 0x4000, scoped, tag = 'output window, operand 0']
    %7 = vsyncpa [#allocation3], 0
    %s8 = scalar_lea.sflag [#allocation3], 1
    %9 = vsyncpa %s8, 0
    %10 = vsyncpa [#allocation6], 0
    %s11 = scalar_lea.sflag [#allocation6], 1
    %12 = vsyncpa %s11, 0
    %13 = vsyncpa [#allocation4], 0
    %s14 = scalar_lea.sflag [#allocation4], 1
    %15 = vsyncpa %s14, 0
    loop: start=0, step=1, limit=4
    $region2: #{tpu_custom_call.1} parent=1 // loop_pre_header
      _
    $region3: #{tpu_custom_call.1} parent=1 // loop_header
      %s17 = sphi 0, %s21
      %p18 = scmp.ge.s32.totalorder %s17, 4
      %s27 = sphi 0, %s29
      %s30 = sphi 0, %s27
      %s31 = sphi 0, %s30
      %s47 = sphi 0, %s31
      %s53 = sphi 0, %s55
      %s56 = sphi 0, %s53
      %s57 = sphi 0, %s56
      %s73 = sphi 0, %s57
      %s79 = sphi 0, %s81
      %s82 = sphi 0, %s79
      %s83 = sphi 0, %s82
      %s99 = sphi 0, %s83
    $region4: #{tpu_custom_call.1} parent=1 // loop_header_branch
      %20 = sbr.rel (%p18) target = $region8
    $region5: #{tpu_custom_call.1} parent=1 // loop_body
      %s22 = ssub.s32 %s17, 1
      %s23 = ssub.s32 %s17, 2
      %s24 = sadd.s32 %s17, 1
      %s25 = ssub.s32 %s17, %s24
      %p26 = scmp.eq.s32.totalorder %s25, 0
      %s28 = sadd.s32 %s27, 1
      %s29 = scalar_select %p26, %s27, %s28
      %p32 = pneg %p26
      %p33 = scmp.eq.s32.totalorder %s17, 1
      %p34 = por %p32, %p33
      %p35 = scmp.ne.s32.totalorder %s27, %s30
      %p36 = scmp.eq.s32.totalorder %s17, 0
      %p37 = por %p35, %p36
      %p38 = scmp.ne.s32.totalorder %s27, %s30
      %p39 = scmp.eq.s32.totalorder %s22, 1
      %p40 = por %p38, %p39
      %p41 = scmp.ne.s32.totalorder %s30, %s31
      %p42 = scmp.eq.s32.totalorder %s22, 0
      %p43 = por %p41, %p42
      %p44 = scmp.ne.s32.totalorder %s30, %s31
      %p45 = scmp.eq.s32.totalorder %s23, 1
      %p46 = por %p44, %p45
      %p48 = scmp.ne.s32.totalorder %s31, %s47
      %p49 = scmp.eq.s32.totalorder %s23, 0
      %p50 = por %p48, %p49
      %s51 = ssub.s32 %s17, %s24
      %p52 = scmp.eq.s32.totalorder %s51, 0
      %s54 = sadd.s32 %s53, 1
      %s55 = scalar_select %p52, %s53, %s54
      %p58 = pneg %p52
      %p59 = scmp.eq.s32.totalorder %s17, 1
      %p60 = por %p58, %p59
      %p61 = scmp.ne.s32.totalorder %s53, %s56
      %p62 = scmp.eq.s32.totalorder %s17, 0
      %p63 = por %p61, %p62
      %p64 = scmp.ne.s32.totalorder %s53, %s56
      %p65 = scmp.eq.s32.totalorder %s22, 1
      %p66 = por %p64, %p65
      %p67 = scmp.ne.s32.totalorder %s56, %s57
      %p68 = scmp.eq.s32.totalorder %s22, 0
      %p69 = por %p67, %p68
      %p70 = scmp.ne.s32.totalorder %s56, %s57
      %p71 = scmp.eq.s32.totalorder %s23, 1
      %p72 = por %p70, %p71
      %p74 = scmp.ne.s32.totalorder %s57, %s73
      %p75 = scmp.eq.s32.totalorder %s23, 0
      %p76 = por %p74, %p75
      %s77 = ssub.s32 %s17, %s24
      %p78 = scmp.eq.s32.totalorder %s77, 0
      %s80 = sadd.s32 %s79, 1
      %s81 = scalar_select %p78, %s79, %s80
      %p84 = pneg %p78
      %p85 = scmp.eq.s32.totalorder %s17, 1
      %p86 = por %p84, %p85
      %p87 = scmp.ne.s32.totalorder %s79, %s82
      %p88 = scmp.eq.s32.totalorder %s17, 0
      %p89 = por %p87, %p88
      %p90 = scmp.ne.s32.totalorder %s79, %s82
      %p91 = scmp.eq.s32.totalorder %s22, 1
      %p92 = por %p90, %p91
      %p93 = scmp.ne.s32.totalorder %s82, %s83
      %p94 = scmp.eq.s32.totalorder %s22, 0
      %p95 = por %p93, %p94
      %p96 = scmp.ne.s32.totalorder %s82, %s83
      %p97 = scmp.eq.s32.totalorder %s23, 1
      %p98 = por %p96, %p97
      %p100 = scmp.ne.s32.totalorder %s83, %s99
      %p101 = scmp.eq.s32.totalorder %s23, 0
      %p102 = por %p100, %p101
      %p103 = scmp.le.s32.totalorder 1, %s17
      %p104 = scmp.lt.s32.totalorder %s17, 3
      %p105 = pnand %p103, %p104
      %p106 = pneg %p105
      // Predicated region
      $region9: #{tpu_custom_call.1} parent=5 // pred_check
        _
      $region10: #{tpu_custom_call.1} parent=5 // pred_check_branch
        %108 = sbr.rel (%p105) target = $region12
      $region11: #{tpu_custom_call.1} parent=5 // pred_region
        %s109 = ssub.s32 %s17, 1
      $region12: #{tpu_custom_call.1} parent=5 // pred_fallthru
        _
      %p110 = scmp.lt.s32.totalorder %s17, 2
      // Predicated region
      $region13: #{tpu_custom_call.1} parent=5 // pred_check
        %p111 = pneg %p110
      $region14: #{tpu_custom_call.1} parent=5 // pred_check_branch
        %113 = sbr.rel (%p111) target = $region16
      $region15: #{tpu_custom_call.1} parent=5 // pred_region
        // Predicated region
        $region17: #{tpu_custom_call.1} parent=15 // pred_check
          %p114 = pneg %p37
        $region18: #{tpu_custom_call.1} parent=15 // pred_check_branch
          %116 = sbr.rel (%p114) target = $region20
        $region19: #{tpu_custom_call.1} parent=15 // pred_region
          %s117 = sand.u32 %s27, 1
          %s118 = scalar_lea.sflag [#allocation3], %s117
          %s119 = sand.u32 %s27, 1
          %s120 = smul.addr %s119, 8
          %s121 = scalar_lea.vmem [#allocation2], %s120
          %s123 = ssub.s32 128, 128
          %124 = vsyncadd %s118, %s123
          %s125 = smul.addr %s17, 2
          %s126 = smul.addr %s125, 64
          %s127 = scalar_lea.hbm %s0, %s126
          %s129 = sshll.u32 %s121, 4
          %s130 = int_to_ptr.vmem [resolvable:$true] %s129
          %132 = dma.hbm_to_vmem [thread:$0]  %s127, 128, %s130, %s118
        $region20: #{tpu_custom_call.1} parent=15 // pred_fallthru
          _
        // Predicated region
        $region21: #{tpu_custom_call.1} parent=15 // pred_check
          %p133 = pneg %p63
        $region22: #{tpu_custom_call.1} parent=15 // pred_check_branch
          %135 = sbr.rel (%p133) target = $region24
        $region23: #{tpu_custom_call.1} parent=15 // pred_region
          %s136 = sand.u32 %s53, 1
          %s137 = scalar_lea.sflag [#allocation6], %s136
          %s138 = sand.u32 %s53, 1
          %s139 = smul.addr %s138, 8
          %s140 = scalar_lea.vmem [#allocation5], %s139
          %s142 = ssub.s32 128, 128
          %143 = vsyncadd %s137, %s142
          %s144 = smul.addr %s17, 2
          %s145 = smul.addr %s144, 64
          %s146 = scalar_lea.hbm %s1, %s145
          %s148 = sshll.u32 %s140, 4
          %s149 = int_to_ptr.vmem [resolvable:$true] %s148
          %151 = dma.hbm_to_vmem [thread:$0]  %s146, 128, %s149, %s137
        $region24: #{tpu_custom_call.1} parent=15 // pred_fallthru
          _
      $region16: #{tpu_custom_call.1} parent=5 // pred_fallthru
        _
      %p152 = scmp.le.s32.totalorder 1, %s17
      %p153 = scmp.lt.s32.totalorder %s17, 3
      %p154 = pnand %p152, %p153
      %p155 = pneg %p154
      // Predicated region
      $region25: #{tpu_custom_call.1} parent=5 // pred_check
        _
      $region26: #{tpu_custom_call.1} parent=5 // pred_check_branch
        %157 = sbr.rel (%p154) target = $region28
      $region27: #{tpu_custom_call.1} parent=5 // pred_region
        %s158 = ssub.s32 %s17, 1
        %s159 = sand.u32 %s30, 1
        %s160 = scalar_lea.sflag [#allocation3], %s159
        %s161 = sand.u32 %s30, 1
        %s162 = smul.addr %s161, 8
        %s163 = scalar_lea.vmem [#allocation2], %s162
        // Predicated region
        $region29: #{tpu_custom_call.1} parent=27 // pred_check
          %p164 = pneg %p43
        $region30: #{tpu_custom_call.1} parent=27 // pred_check_branch
          %166 = sbr.rel (%p164) target = $region32
        $region31: #{tpu_custom_call.1} parent=27 // pred_region
          %167 = dma.done %s160, 128
        $region32: #{tpu_custom_call.1} parent=27 // pred_fallthru
          _
        %s168 = sand.u32 %s56, 1
        %s169 = scalar_lea.sflag [#allocation6], %s168
        %s170 = sand.u32 %s56, 1
        %s171 = smul.addr %s170, 8
        %s172 = scalar_lea.vmem [#allocation5], %s171
        // Predicated region
        $region33: #{tpu_custom_call.1} parent=27 // pred_check
          %p173 = pneg %p69
        $region34: #{tpu_custom_call.1} parent=27 // pred_check_branch
          %175 = sbr.rel (%p173) target = $region36
        $region35: #{tpu_custom_call.1} parent=27 // pred_region
          %176 = dma.done %s169, 128
        $region36: #{tpu_custom_call.1} parent=27 // pred_fallthru
          _
        %s177 = sand.u32 %s30, 1
        %s178 = scalar_lea.sflag [#allocation3], %s177
        %s179 = sand.u32 %s30, 1
        %s180 = smul.addr %s179, 8
        %s181 = scalar_lea.vmem [#allocation2], %s180
        %p182 = pneg %p43
        %p183 = pneg %p40
        %s184 = sand.u32 %s56, 1
        %s185 = scalar_lea.sflag [#allocation6], %s184
        %s186 = sand.u32 %s56, 1
        %s187 = smul.addr %s186, 8
        %s188 = scalar_lea.vmem [#allocation5], %s187
        %p189 = pneg %p69
        %p190 = pneg %p66
        %p191 = pneg %p95
        %p192 = pneg %p92
        %s193 = sand.u32 %s82, 1
        %s194 = scalar_lea.sflag [#allocation4], %s193
        %s195 = sand.u32 %s82, 1
        %s196 = smul.addr %s195, 16
        %s197 = scalar_lea.vmem [#allocation7], %s196
        %vm198 = vcmask 134144
        %199 = vst.msk [vmem:[%s197] sm:$0xf] %vm198, 0.0
        %v200 = vld [vmem:[%s163] sm:$0xf]
        %202 = vrot.lane.b32.xlu0 %v200, 17
        %v203 = vpop.permute.xlu0 %202
        %vm205 = vcmask 248968
        %206 = vst.msk [vmem:[%s197] sm:$0xf] %vm205, %v203
        %vm207 = vcmask 265464
        %208 = vst.msk [vmem:[%s197] sm:$0xf] %vm207, 0.0
        %v209 = vld [vmem:[%s163] sm:$0xf]
        %211 = vrot.lane.b32.xlu0 %v209, 19
        %v212 = vpop.permute.xlu0 %211
        %vm214 = vcmask 380168
        %215 = vst.msk [vmem:[%s197] sm:$0xf] %vm214, %v212
        %vm216 = vcmask 396664
        %217 = vst.msk [vmem:[%s197] sm:$0xf] %vm216, 0.0
        %v218 = vld [vmem:[%s163] sm:$0xf]
        %220 = vrot.lane.b32.xlu0 %v218, 21
        %v221 = vpop.permute.xlu0 %220
        %vm223 = vcmask 511368
        %224 = vst.msk [vmem:[%s197] sm:$0xf] %vm223, %v221
        %vm225 = vcmask 527864
        %226 = vst.msk [vmem:[%s197] sm:$0xf] %vm225, 0.0
        %v227 = vld [vmem:[%s163] sm:$0xf]
        %229 = vrot.lane.b32.xlu0 %v227, 23
        %v230 = vpop.permute.xlu0 %229
        %vm232 = vcmask 642568
        %233 = vst.msk [vmem:[%s197] sm:$0xf] %vm232, %v230
        %vm234 = vcmask 659064
        %235 = vst.msk [vmem:[%s197] sm:$0xf] %vm234, 0.0
        %v236 = vld [vmem:[%s163] sm:$0xf]
        %238 = vrot.lane.b32.xlu0 %v236, 25
        %v239 = vpop.permute.xlu0 %238
        %vm241 = vcmask 773768
        %242 = vst.msk [vmem:[%s197] sm:$0xf] %vm241, %v239
        %vm243 = vcmask 790264
        %244 = vst.msk [vmem:[%s197] sm:$0xf] %vm243, 0.0
        %v245 = vld [vmem:[%s163] sm:$0xf]
        %247 = vrot.lane.b32.xlu0 %v245, 27
        %v248 = vpop.permute.xlu0 %247
        %vm250 = vcmask 904968
        %251 = vst.msk [vmem:[%s197] sm:$0xf] %vm250, %v248
        %vm252 = vcmask 921464
        %253 = vst.msk [vmem:[%s197] sm:$0xf] %vm252, 0.0
        %v254 = vld [vmem:[%s163] sm:$0xf]
        %256 = vrot.lane.b32.xlu0 %v254, 29
        %v257 = vpop.permute.xlu0 %256
        %vm259 = vcmask 1036168
        %260 = vst.msk [vmem:[%s197] sm:$0xf] %vm259, %v257
        %vm261 = vcmask 1044472
        %262 = vst.msk [vmem:[%s197] sm:$0xf] %vm261, 0.0
        %vm263 = vcmask 3072
        %264 = vst.msk [vmem:[%s197 + $0x8] sm:$0xf] %vm263, 0.0
        %v265 = vld [vmem:[%s163] sm:$0xf]
        %267 = vrot.lane.b32.xlu0 %v265, 31
        %v268 = vpop.permute.xlu0 %267
        %vm270 = vcmask 117768
        %271 = vst.msk [vmem:[%s197 + $0x8] sm:$0xf] %vm270, %v268
        %vm272 = vcmask 134264
        %273 = vst.msk [vmem:[%s197 + $0x8] sm:$0xf] %vm272, 0.0
        %v274 = vld [vmem:[%s163] sm:$0xf]
        %276 = vrot.lane.b32.xlu0 %v274, 33
        %v277 = vpop.permute.xlu0 %276
        %279 = vst.msk [vmem:[%s197 + $0x8] sm:$0xf] %vm205, %v277
        %280 = vst.msk [vmem:[%s197 + $0x8] sm:$0xf] %vm207, 0.0
        %v281 = vld [vmem:[%s163] sm:$0xff]
        %v283 = vcombine.high %v281, %v281
        %284 = vrot.lane.b32.xlu0 %v281, 35
        %v285 = vpop.permute.xlu0 %284
        %286 = vrot.lane.b32.xlu0 %v283, 35
        %v287 = vpop.permute.xlu0 %286
        %vm288 = vcmask 285696
        %v289 = vsel %vm288, %v285, %v287
        %291 = vst.msk [vmem:[%s197 + $0x8] sm:$0xf] %vm214, %v289
        %292 = vst.msk [vmem:[%s197 + $0x8] sm:$0xf] %vm216, 0.0
        %v293 = vld [vmem:[%s163 + $0x4] sm:$0xf]
        %295 = vrot.lane.b32.xlu0 %v293, 37
        %v296 = vpop.permute.xlu0 %295
        %298 = vst.msk [vmem:[%s197 + $0x8] sm:$0xf] %vm223, %v296
        %299 = vst.msk [vmem:[%s197 + $0x8] sm:$0xf] %vm225, 0.0
        %v300 = vld [vmem:[%s163 + $0x4] sm:$0xf]
        %302 = vrot.lane.b32.xlu0 %v300, 39
        %v303 = vpop.permute.xlu0 %302
        %305 = vst.msk [vmem:[%s197 + $0x8] sm:$0xf] %vm232, %v303
        %306 = vst.msk [vmem:[%s197 + $0x8] sm:$0xf] %vm234, 0.0
        %v307 = vld [vmem:[%s163 + $0x4] sm:$0xf]
        %309 = vrot.lane.b32.xlu0 %v307, 41
        %v310 = vpop.permute.xlu0 %309
        %312 = vst.msk [vmem:[%s197 + $0x8] sm:$0xf] %vm241, %v310
        %313 = vst.msk [vmem:[%s197 + $0x8] sm:$0xf] %vm243, 0.0
        %v314 = vld [vmem:[%s163 + $0x4] sm:$0xf]
        %316 = vrot.lane.b32.xlu0 %v314, 43
        %v317 = vpop.permute.xlu0 %316
        %319 = vst.msk [vmem:[%s197 + $0x8] sm:$0xf] %vm250, %v317
        %vm320 = vcmask 1044344
        %321 = vst.msk [vmem:[%s197 + $0x8] sm:$0xf] %vm320, 0.0
        %v322 = vld [vmem:[%s172] sm:$0xff]
        %v324 = vcombine.low %v322, %v322
        %326 = vst [vmem:[%s197] sm:$0xf0] %v324
        %327 = vst [vmem:[%s197 + $0x8] sm:$0xf0] %v322
        %s328 = sand.u32 %s82, 1
        %s329 = scalar_lea.sflag [#allocation4], %s328
        %s330 = sand.u32 %s82, 1
        %s331 = smul.addr %s330, 16
        %s332 = scalar_lea.vmem [#allocation7], %s331
        // Predicated region
        $region37: #{tpu_custom_call.1} parent=27 // pred_check
          %p333 = pneg %p92
        $region38: #{tpu_custom_call.1} parent=27 // pred_check_branch
          %335 = sbr.rel (%p333) target = $region40
        $region39: #{tpu_custom_call.1} parent=27 // pred_region
          %s337 = ssub.s32 256, 256
          %338 = vsyncadd %s329, %s337
          %s339 = smul.addr %s22, 2
          %s340 = smul.addr %s339, 128
          %s341 = scalar_lea.hbm %s2, %s340
          %s343 = sshll.u32 %s332, 4
          %s344 = int_to_ptr.vmem [resolvable:$true] %s343
          %346 = dma.vmem_to_hbm [thread:$0]  %s344, 256, %s341, %s329
        $region40: #{tpu_custom_call.1} parent=27 // pred_fallthru
          _
      $region28: #{tpu_custom_call.1} parent=5 // pred_fallthru
        _
      %p347 = scmp.le.s32.totalorder 2, %s17
      // Predicated region
      $region41: #{tpu_custom_call.1} parent=5 // pred_check
        %p348 = pneg %p347
      $region42: #{tpu_custom_call.1} parent=5 // pred_check_branch
        %350 = sbr.rel (%p348) target = $region44
      $region43: #{tpu_custom_call.1} parent=5 // pred_region
        %s351 = ssub.s32 %s17, 2
        // Predicated region
        $region45: #{tpu_custom_call.1} parent=43 // pred_check
          %p352 = pneg %p98
        $region46: #{tpu_custom_call.1} parent=43 // pred_check_branch
          %354 = sbr.rel (%p352) target = $region48
        $region47: #{tpu_custom_call.1} parent=43 // pred_region
          %s355 = sand.u32 %s83, 1
          %s356 = scalar_lea.sflag [#allocation4], %s355
          %s357 = sand.u32 %s83, 1
          %s358 = smul.addr %s357, 16
          %s359 = scalar_lea.vmem [#allocation7], %s358
          %360 = dma.done %s356, 256
        $region48: #{tpu_custom_call.1} parent=43 // pred_fallthru
          _
      $region44: #{tpu_custom_call.1} parent=5 // pred_fallthru
        _
    $region6: #{tpu_custom_call.1} parent=1 // loop_footer
      %s21 = sadd.s32 1, %s17
    $region7: #{tpu_custom_call.1} parent=1 // loop_footer_branch
      %16 = sbr.rel target = $region3
    $region8: #{tpu_custom_call.1} parent=1 // loop_exit
      _
    %361 = vsyncpa [#allocation3], 1
    %s362 = scalar_lea.sflag [#allocation3], 1
    %363 = vsyncpa %s362, 1
    %364 = vsyncpa [#allocation6], 1
    %s365 = scalar_lea.sflag [#allocation6], 1
    %366 = vsyncpa %s365, 1
    %367 = vsyncpa [#allocation4], 1
    %s368 = scalar_lea.sflag [#allocation4], 1
    %369 = vsyncpa %s368, 1

</llo_original>
